<compile_context>
chip_gen: v6e
topology: v6e:2x2x1
jax: 0.10.0
libtpu: 0.0.40
codegen_flags: <defaults>
</compile_context>

<pallas_src>
import functools

import jax
import jax.numpy as jnp
from jax.experimental import pallas as pl
from jax.experimental.pallas import tpu as pltpu


def _round_up(x, m):
    return ((x + m - 1) // m) * m


def _fused_mlp_kernel(*refs):
    """refs = (x_ref, w0, b0, w1, b1, ..., o_ref). Layer loop is unrolled at trace time."""
    x_ref = refs[0]
    o_ref = refs[-1]
    wb_refs = refs[1:-1]

    h = x_ref[...].astype(jnp.float32)
    for i in range(0, len(wb_refs), 2):
        w = wb_refs[i][...]
        b = wb_refs[i + 1][...]
        # MXU matmul with f32 accumulate, bias add on VPU, tanh on EUP.
        h = jnp.tanh(jnp.dot(h, w, preferred_element_type=jnp.float32) + b)
    o_ref[...] = h.astype(o_ref.dtype)


@jax.jit
def singe_dnn_embedding_forward(x, params):
    """Forward pass of singeDNN_Embedding: fused sequence of (Linear -> Tanh)."""
    B, Din = x.shape
    n_layers = len(params)
    Dout = params[-1][0].shape[1]

    # --- pad feature dims to 128 lanes, batch to a multiple of the batch tile ---
    LANE = 128
    Din_pad = _round_up(Din, LANE)
    # Batch tile: MXU-edge sized (256) when the batch is large, else just the
    # sublane-aligned batch.  At these layer widths VMEM usage is trivially
    # small on every TPU generation (incl. v7x's 64 MiB).
    TB = 256 if B >= 256 else _round_up(B, 8)
    B_pad = _round_up(B, TB)

    x_pad = jnp.zeros((B_pad, Din_pad), x.dtype).at[:B, :Din].set(x)

    padded_params = []
    d_in, d_in_pad = Din, Din_pad
    for (w, b) in params:
        d_out = w.shape[1]
        d_out_pad = _round_up(d_out, LANE)
        w_pad = jnp.zeros((d_in_pad, d_out_pad), w.dtype).at[:d_in, :d_out].set(w)
        b_pad = jnp.zeros((1, d_out_pad), b.dtype).at[:, :d_out].set(b)
        padded_params += [w_pad, b_pad]
        d_in, d_in_pad = d_out, d_out_pad
    Dout_pad = d_in_pad  # padded width of the last layer

    # --- BlockSpecs: batch-tiled activations, pinned (resident) weights/bias ---
    in_specs = [pl.BlockSpec((TB, Din_pad), lambda i: (i, 0))]
    for li in range(n_layers):
        w_pad = padded_params[2 * li]
        b_pad = padded_params[2 * li + 1]
        in_specs.append(pl.BlockSpec(w_pad.shape, lambda i: (0, 0)))
        in_specs.append(pl.BlockSpec(b_pad.shape, lambda i: (0, 0)))

    out_pad = pl.pallas_call(
        _fused_mlp_kernel,
        out_shape=jax.ShapeDtypeStruct((B_pad, Dout_pad), x.dtype),
        grid=(B_pad // TB,),
        in_specs=in_specs,
        out_specs=pl.BlockSpec((TB, Dout_pad), lambda i: (i, 0)),
        compiler_params=pltpu.CompilerParams(
            dimension_semantics=("parallel",)
        ),
    )(x_pad, *padded_params)

    # Slice away batch + lane padding in the wrapper.
    return out_pad[:B, :Dout]


def init_params(key, input_size, hidden_struct, dtype=jnp.float32):
    """Deterministic init mirroring PyTorch nn.Linear default (U(-1/sqrt(fan_in), +))."""
    params = []
    d_in = input_size
    for d_out in hidden_struct:
        key, kw, kb = jax.random.split(key, 3)
        bound = 1.0 / (d_in ** 0.5)
        # PyTorch weight is (out, in); we store transposed (in, out) for the kernel.
        w = jax.random.uniform(kw, (d_in, d_out), dtype, minval=-bound, maxval=bound)
        b = jax.random.uniform(kb, (1, d_out), dtype, minval=-bound, maxval=bound)
        params.append((w, b))
        d_in = d_out
    return params


def reference_forward(x, params):
    h = x
    for (w, b) in params:
        h = jnp.tanh(h @ w + b)
    return h


if __name__ == "__main__":
    input_size = 16
    hidden_struct = [32, 64, 32]
    batch = 8

    key = jax.random.PRNGKey(0)
    key, kx = jax.random.split(key)
    x = jax.random.normal(kx, (batch, input_size), dtype=jnp.float32)

    params = init_params(key, input_size, hidden_struct)

    out = singe_dnn_embedding_forward(x, params)
    out = jax.block_until_ready(out)

    ref = reference_forward(x, params)
    assert out.shape == (batch, hidden_struct[-1])
    assert jnp.allclose(out, ref, atol=1e-5, rtol=1e-5)

    print("KERNEL_OK")
</pallas_src>

<mosaic_0001>
module attributes {stable_mosaic.version = 11 : i64} {
  func.func @_fused_mlp_kernel(%arg0: i32, %arg1: memref<8x128xf32, #tpu.memory_space<vmem>>, %arg2: memref<128x128xf32, #tpu.memory_space<vmem>>, %arg3: memref<1x128xf32, #tpu.memory_space<vmem>>, %arg4: memref<128x128xf32, #tpu.memory_space<vmem>>, %arg5: memref<1x128xf32, #tpu.memory_space<vmem>>, %arg6: memref<128x128xf32, #tpu.memory_space<vmem>>, %arg7: memref<1x128xf32, #tpu.memory_space<vmem>>, %arg8: memref<8x128xf32, #tpu.memory_space<vmem>>) attributes {dimension_semantics = [#tpu.dimension_semantics<parallel>], iteration_bounds = array<i64: 1>, scalar_prefetch = 0 : i64, scratch_operands = 0 : i64, tpu.core_type = #tpu.core_type<tc>, window_params = [{transform_indices = @transform_0, window_bounds = array<i64: 8, 128>}, {pipeline_mode = #tpu.pipeline_mode<synchronous>, transform_indices = @transform_1, window_bounds = array<i64: 128, 128>}, {pipeline_mode = #tpu.pipeline_mode<synchronous>, transform_indices = @transform_2, window_bounds = array<i64: 1, 128>}, {pipeline_mode = #tpu.pipeline_mode<synchronous>, transform_indices = @transform_3, window_bounds = array<i64: 128, 128>}, {pipeline_mode = #tpu.pipeline_mode<synchronous>, transform_indices = @transform_4, window_bounds = array<i64: 1, 128>}, {pipeline_mode = #tpu.pipeline_mode<synchronous>, transform_indices = @transform_5, window_bounds = array<i64: 128, 128>}, {pipeline_mode = #tpu.pipeline_mode<synchronous>, transform_indices = @transform_6, window_bounds = array<i64: 1, 128>}, {transform_indices = @transform_7, window_bounds = array<i64: 8, 128>}]} {
    %c0 = arith.constant 0 : index
    %c0_0 = arith.constant 0 : index
    %0 = vector.load %arg1[%c0, %c0_0] : memref<8x128xf32, #tpu.memory_space<vmem>>, vector<8x128xf32>
    %c0_1 = arith.constant 0 : index
    %c0_2 = arith.constant 0 : index
    %1 = vector.load %arg2[%c0_1, %c0_2] : memref<128x128xf32, #tpu.memory_space<vmem>>, vector<128x128xf32>
    %c0_3 = arith.constant 0 : index
    %c0_4 = arith.constant 0 : index
    %2 = vector.load %arg3[%c0_3, %c0_4] : memref<1x128xf32, #tpu.memory_space<vmem>>, vector<1x128xf32>
    %cst = arith.constant dense<0.000000e+00> : vector<8x128xf32>
    %3 = tpu.matmul %0, %1, %cst {dimension_numbers = #tpu.dot_dimension_numbers<[1], [0], [0], [1], [0, 0, 1, 1], [], []>} : vector<8x128xf32>, vector<128x128xf32>, vector<8x128xf32> -> vector<8x128xf32>
    %4 = vector.broadcast %2 : vector<1x128xf32> to vector<8x128xf32>
    %5 = arith.addf %3, %4 : vector<8x128xf32>
    %6 = math.tanh %5 : vector<8x128xf32>
    %c0_5 = arith.constant 0 : index
    %c0_6 = arith.constant 0 : index
    %7 = vector.load %arg4[%c0_5, %c0_6] : memref<128x128xf32, #tpu.memory_space<vmem>>, vector<128x128xf32>
    %c0_7 = arith.constant 0 : index
    %c0_8 = arith.constant 0 : index
    %8 = vector.load %arg5[%c0_7, %c0_8] : memref<1x128xf32, #tpu.memory_space<vmem>>, vector<1x128xf32>
    %cst_9 = arith.constant dense<0.000000e+00> : vector<8x128xf32>
    %9 = tpu.matmul %6, %7, %cst_9 {dimension_numbers = #tpu.dot_dimension_numbers<[1], [0], [0], [1], [0, 0, 1, 1], [], []>} : vector<8x128xf32>, vector<128x128xf32>, vector<8x128xf32> -> vector<8x128xf32>
    %10 = vector.broadcast %8 : vector<1x128xf32> to vector<8x128xf32>
    %11 = arith.addf %9, %10 : vector<8x128xf32>
    %12 = math.tanh %11 : vector<8x128xf32>
    %c0_10 = arith.constant 0 : index
    %c0_11 = arith.constant 0 : index
    %13 = vector.load %arg6[%c0_10, %c0_11] : memref<128x128xf32, #tpu.memory_space<vmem>>, vector<128x128xf32>
    %c0_12 = arith.constant 0 : index
    %c0_13 = arith.constant 0 : index
    %14 = vector.load %arg7[%c0_12, %c0_13] : memref<1x128xf32, #tpu.memory_space<vmem>>, vector<1x128xf32>
    %cst_14 = arith.constant dense<0.000000e+00> : vector<8x128xf32>
    %15 = tpu.matmul %12, %13, %cst_14 {dimension_numbers = #tpu.dot_dimension_numbers<[1], [0], [0], [1], [0, 0, 1, 1], [], []>} : vector<8x128xf32>, vector<128x128xf32>, vector<8x128xf32> -> vector<8x128xf32>
    %16 = vector.broadcast %14 : vector<1x128xf32> to vector<8x128xf32>
    %17 = arith.addf %15, %16 : vector<8x128xf32>
    %18 = math.tanh %17 : vector<8x128xf32>
    %c0_15 = arith.constant 0 : index
    %c0_16 = arith.constant 0 : index
    %19 = vector.load %arg8[%c0_15, %c0_16] : memref<8x128xf32, #tpu.memory_space<vmem>>, vector<8x128xf32>
    tpu.vector_store %arg8[%c0_15, %c0_16], %18 {strides = array<i32>} : memref<8x128xf32, #tpu.memory_space<vmem>>, vector<8x128xf32>,
    return
  }
  func.func @transform_0(%arg0: i32) -> (i32, i32) {
    %c0_i32 = arith.constant 0 : i32
    %c0_i32_0 = arith.constant 0 : i32
    return %arg0, %c0_i32 : i32, i32
  }
  func.func @transform_1(%arg0: i32) -> (i32, i32) {
    %c0_i32 = arith.constant 0 : i32
    %c0_i32_0 = arith.constant 0 : i32
    %c0_i32_1 = arith.constant 0 : i32
    return %c0_i32, %c0_i32_0 : i32, i32
  }
  func.func @transform_2(%arg0: i32) -> (i32, i32) {
    %c0_i32 = arith.constant 0 : i32
    %c0_i32_0 = arith.constant 0 : i32
    %c0_i32_1 = arith.constant 0 : i32
    return %c0_i32, %c0_i32_0 : i32, i32
  }
  func.func @transform_3(%arg0: i32) -> (i32, i32) {
    %c0_i32 = arith.constant 0 : i32
    %c0_i32_0 = arith.constant 0 : i32
    %c0_i32_1 = arith.constant 0 : i32
    return %c0_i32, %c0_i32_0 : i32, i32
  }
  func.func @transform_4(%arg0: i32) -> (i32, i32) {
    %c0_i32 = arith.constant 0 : i32
    %c0_i32_0 = arith.constant 0 : i32
    %c0_i32_1 = arith.constant 0 : i32
    return %c0_i32, %c0_i32_0 : i32, i32
  }
  func.func @transform_5(%arg0: i32) -> (i32, i32) {
    %c0_i32 = arith.constant 0 : i32
    %c0_i32_0 = arith.constant 0 : i32
    %c0_i32_1 = arith.constant 0 : i32
    return %c0_i32, %c0_i32_0 : i32, i32
  }
  func.func @transform_6(%arg0: i32) -> (i32, i32) {
    %c0_i32 = arith.constant 0 : i32
    %c0_i32_0 = arith.constant 0 : i32
    %c0_i32_1 = arith.constant 0 : i32
    return %c0_i32, %c0_i32_0 : i32, i32
  }
  func.func @transform_7(%arg0: i32) -> (i32, i32) {
    %c0_i32 = arith.constant 0 : i32
    %c0_i32_0 = arith.constant 0 : i32
    return %arg0, %c0_i32 : i32, i32
  }
}

</mosaic_0001>

<llo_original>
// kernel: singe_dnn_embedding_forward.1
$region0: #{singe_dnn_embedding_forward.1}
  #allocation0 [shape = 'u32[]', space=smem, size = 0x4, offset = 0x4, fixed_abs, tag = 'smem constant byte address 0x4 - core index']
  #allocation1 [shape = 'u32[144,128]{1,0:T(1,128)}', space=vmem, size = 0x12000, scoped, tag = 'internal scratch']
  %s0 = inlined_call_operand.vmem [shape: f32[8,128], index: 0, kind: input, shape index: {}]
  %s1 = inlined_call_operand.vmem [shape: f32[128,128], index: 1, kind: input, shape index: {}]
  %s2 = inlined_call_operand.vmem [shape: f32[1,128], index: 2, kind: input, shape index: {}]
  %s3 = inlined_call_operand.vmem [shape: f32[128,128], index: 3, kind: input, shape index: {}]
  %s4 = inlined_call_operand.vmem [shape: f32[1,128], index: 4, kind: input, shape index: {}]
  %s5 = inlined_call_operand.vmem [shape: f32[128,128], index: 5, kind: input, shape index: {}]
  %s6 = inlined_call_operand.vmem [shape: f32[1,128], index: 6, kind: input, shape index: {}]
  %s7 = inlined_call_operand.hbm [shape: f32[8,128], index: 7, kind: output, shape index: {}]
  %s8 = sld [smem:[#allocation0]]
  $region38: #{singe_dnn_embedding_forward.1} parent=0
    _
  %s10 = ssub.s32 1, %s8
  %s11 = scalar_select 0, %s10, %s8
  $region1: #{singe_dnn_embedding_forward.1} parent=0
    #allocation2 [shape = 'u8[4096]{0}', space=vmem, size = 0x1000, scoped, tag = 'output window, operand 0, single buffered']
    #allocation3 [shape = 's32[1]{0}', space=sflag, size = 0x4, scoped, tag = 'scoped memory for singe_dnn_embedding_forward.1']
    %12 = vsyncpa [#allocation3], 0
    // Predicated region
    $region2: #{singe_dnn_embedding_forward.1} parent=1 // pred_check
      _
    $region3: #{singe_dnn_embedding_forward.1} parent=1 // pred_check_branch
      %14 = sbr.rel (0) target = $region5
    $region4: #{singe_dnn_embedding_forward.1} parent=1 // pred_region
      _
    $region5: #{singe_dnn_embedding_forward.1} parent=1 // pred_fallthru
      _
    // Predicated region
    $region6: #{singe_dnn_embedding_forward.1} parent=1 // pred_check
      _
    $region7: #{singe_dnn_embedding_forward.1} parent=1 // pred_check_branch
      %16 = sbr.rel (0) target = $region9
    $region8: #{singe_dnn_embedding_forward.1} parent=1 // pred_region
      _
    $region9: #{singe_dnn_embedding_forward.1} parent=1 // pred_fallthru
      _
    // Predicated region
    $region10: #{singe_dnn_embedding_forward.1} parent=1 // pred_check
      _
    $region11: #{singe_dnn_embedding_forward.1} parent=1 // pred_check_branch
      %18 = sbr.rel (0) target = $region13
    $region12: #{singe_dnn_embedding_forward.1} parent=1 // pred_region
      _
    $region13: #{singe_dnn_embedding_forward.1} parent=1 // pred_fallthru
      _
    // Predicated region
    $region14: #{singe_dnn_embedding_forward.1} parent=1 // pred_check
      _
    $region15: #{singe_dnn_embedding_forward.1} parent=1 // pred_check_branch
      %20 = sbr.rel (0) target = $region17
    $region16: #{singe_dnn_embedding_forward.1} parent=1 // pred_region
      _
    $region17: #{singe_dnn_embedding_forward.1} parent=1 // pred_fallthru
      _
    // Predicated region
    $region18: #{singe_dnn_embedding_forward.1} parent=1 // pred_check
      _
    $region19: #{singe_dnn_embedding_forward.1} parent=1 // pred_check_branch
      %22 = sbr.rel (0) target = $region21
    $region20: #{singe_dnn_embedding_forward.1} parent=1 // pred_region
      _
    $region21: #{singe_dnn_embedding_forward.1} parent=1 // pred_fallthru
      _
    // Predicated region
    $region22: #{singe_dnn_embedding_forward.1} parent=1 // pred_check
      _
    $region23: #{singe_dnn_embedding_forward.1} parent=1 // pred_check_branch
      %24 = sbr.rel (0) target = $region25
    $region24: #{singe_dnn_embedding_forward.1} parent=1 // pred_region
      _
    $region25: #{singe_dnn_embedding_forward.1} parent=1 // pred_fallthru
      _
    // Predicated region
    $region26: #{singe_dnn_embedding_forward.1} parent=1 // pred_check
      _
    $region27: #{singe_dnn_embedding_forward.1} parent=1 // pred_check_branch
      %26 = sbr.rel (0) target = $region29
    $region28: #{singe_dnn_embedding_forward.1} parent=1 // pred_region
      _
    $region29: #{singe_dnn_embedding_forward.1} parent=1 // pred_fallthru
      _
    %v27 = vld [vmem:[%s0] sm:$0xff]
    %v28 = vld [vmem:[%s1] sm:$0xff]
    %v29 = vld [vmem:[%s1 + $0x8] sm:$0xff]
    %v30 = vld [vmem:[%s1 + $0x10] sm:$0xff]
    %v31 = vld [vmem:[%s1 + $0x18] sm:$0xff]
    %v32 = vld [vmem:[%s1 + $0x20] sm:$0xff]
    %v33 = vld [vmem:[%s1 + $0x28] sm:$0xff]
    %v34 = vld [vmem:[%s1 + $0x30] sm:$0xff]
    %v35 = vld [vmem:[%s1 + $0x38] sm:$0xff]
    %v36 = vld [vmem:[%s1 + $0x40] sm:$0xff]
    %v37 = vld [vmem:[%s1 + $0x48] sm:$0xff]
    %v38 = vld [vmem:[%s1 + $0x50] sm:$0xff]
    %v39 = vld [vmem:[%s1 + $0x58] sm:$0xff]
    %v40 = vld [vmem:[%s1 + $0x60] sm:$0xff]
    %v41 = vld [vmem:[%s1 + $0x68] sm:$0xff]
    %v42 = vld [vmem:[%s1 + $0x70] sm:$0xff]
    %v43 = vld [vmem:[%s1 + $0x78] sm:$0xff]
    %v44 = vld [vmem:[%s2] sm:$0x1]
    %v46 = vlaneseq
    %v47 = vshrl.u32 %v46, 7
    %v48 = vsub.s32 0, %v47
    %v49 = vrot.slane %v44, %v48
    %51 = vmatprep.subr.mxu0 0.0
    %52 = vmatpush1.msra.mxu0 %v43
    %53 = vmatprep.subr.mxu0 0.0
    %54 = vmatpush1.msra.mxu0 %v42
    %55 = vmatprep.subr.mxu0 0.0
    %56 = vmatpush1.msra.mxu0 %v41
    %57 = vmatprep.subr.mxu0 0.0
    %58 = vmatpush1.msra.mxu0 %v40
    %59 = vmatprep.subr.mxu0 0.0
    %60 = vmatpush1.msra.mxu0 %v39
    %61 = vmatprep.subr.mxu0 0.0
    %62 = vmatpush1.msra.mxu0 %v38
    %63 = vmatprep.subr.mxu0 0.0
    %64 = vmatpush1.msra.mxu0 %v37
    %65 = vmatprep.subr.mxu0 0.0
    %66 = vmatpush1.msra.mxu0 %v36
    %67 = vmatprep.subr.mxu0 0.0
    %68 = vmatpush1.msra.mxu0 %v35
    %69 = vmatprep.subr.mxu0 0.0
    %70 = vmatpush1.msra.mxu0 %v34
    %71 = vmatprep.subr.mxu0 0.0
    %72 = vmatpush1.msra.mxu0 %v33
    %73 = vmatprep.subr.mxu0 0.0
    %74 = vmatpush1.msra.mxu0 %v32
    %75 = vmatprep.subr.mxu0 0.0
    %76 = vmatpush1.msra.mxu0 %v31
    %77 = vmatprep.subr.mxu0 0.0
    %78 = vmatpush1.msra.mxu0 %v30
    %79 = vmatprep.subr.mxu0 0.0
    %80 = vmatpush1.msra.mxu0 %v29
    %81 = vmatprep.subr.mxu0 0.0
    %82 = vmatpush1.msra.mxu0 %v28
    %83 = vmatprep.subr.mxu0 0.0
    %84 = vmatpush2.msra.mxu0 0.0
    %85 = vmatprep.subr.mxu0 0.0
    %86 = vmatpush2.msra.mxu0 0.0
    %87 = vmatprep.subr.mxu0 0.0
    %88 = vmatpush2.msra.mxu0 0.0
    %89 = vmatprep.subr.mxu0 0.0
    %90 = vmatpush2.msra.mxu0 0.0
    %91 = vmatprep.subr.mxu0 0.0
    %92 = vmatpush2.msra.mxu0 0.0
    %93 = vmatprep.subr.mxu0 0.0
    %94 = vmatpush2.msra.mxu0 0.0
    %95 = vmatprep.subr.mxu0 0.0
    %96 = vmatpush2.msra.mxu0 0.0
    %97 = vmatprep.subr.mxu0 0.0
    %98 = vmatpush2.msra.mxu0 0.0
    %99 = vmatprep.subr.mxu0 0.0
    %100 = vmatpush2.msra.mxu0 0.0
    %101 = vmatprep.subr.mxu0 0.0
    %102 = vmatpush2.msra.mxu0 0.0
    %103 = vmatprep.subr.mxu0 0.0
    %104 = vmatpush2.msra.mxu0 0.0
    %105 = vmatprep.subr.mxu0 0.0
    %106 = vmatpush2.msra.mxu0 0.0
    %107 = vmatprep.subr.mxu0 0.0
    %108 = vmatpush2.msra.mxu0 0.0
    %109 = vmatprep.subr.mxu0 0.0
    %110 = vmatpush2.msra.mxu0 0.0
    %111 = vmatprep.subr.mxu0 0.0
    %112 = vmatpush2.msra.mxu0 0.0
    %113 = vmatprep.subr.mxu0 0.0
    %114 = vmatpush2.msra.mxu0 0.0
    %115 = vmatprep.mubr.f32.mxu0 0.0
    %116 = vmatmul.mubr.f32.gmra.mxu0 %v27
    %v117 = vpop.f32.mrf.mxu0
    %v118 = vadd.f32 %v49, %v117
    %v119 = vpop.f32.mrf.mxu0
    %120 = vdwg.mxu0
    %v121 = vtanh.pop %v118
    %v122 = vld [vmem:[%s3] sm:$0xff]
    %v123 = vld [vmem:[%s3 + $0x8] sm:$0xff]
    %v124 = vld [vmem:[%s3 + $0x10] sm:$0xff]
    %v125 = vld [vmem:[%s3 + $0x18] sm:$0xff]
    %v126 = vld [vmem:[%s3 + $0x20] sm:$0xff]
    %v127 = vld [vmem:[%s3 + $0x28] sm:$0xff]
    %v128 = vld [vmem:[%s3 + $0x30] sm:$0xff]
    %v129 = vld [vmem:[%s3 + $0x38] sm:$0xff]
    %v130 = vld [vmem:[%s3 + $0x40] sm:$0xff]
    %v131 = vld [vmem:[%s3 + $0x48] sm:$0xff]
    %v132 = vld [vmem:[%s3 + $0x50] sm:$0xff]
    %v133 = vld [vmem:[%s3 + $0x58] sm:$0xff]
    %v134 = vld [vmem:[%s3 + $0x60] sm:$0xff]
    %v135 = vld [vmem:[%s3 + $0x68] sm:$0xff]
    %v136 = vld [vmem:[%s3 + $0x70] sm:$0xff]
    %v137 = vld [vmem:[%s3 + $0x78] sm:$0xff]
    %v138 = vld [vmem:[%s4] sm:$0x1]
    %v140 = vlaneseq
    %v141 = vshrl.u32 %v140, 7
    %v142 = vsub.s32 0, %v141
    %v143 = vrot.slane %v138, %v142
    %145 = vmatprep.subr.mxu0 0.0
    %146 = vmatpush1.msra.mxu0 %v137
    %147 = vmatprep.subr.mxu0 0.0
    %148 = vmatpush1.msra.mxu0 %v136
    %149 = vmatprep.subr.mxu0 0.0
    %150 = vmatpush1.msra.mxu0 %v135
    %151 = vmatprep.subr.mxu0 0.0
    %152 = vmatpush1.msra.mxu0 %v134
    %153 = vmatprep.subr.mxu0 0.0
    %154 = vmatpush1.msra.mxu0 %v133
    %155 = vmatprep.subr.mxu0 0.0
    %156 = vmatpush1.msra.mxu0 %v132
    %157 = vmatprep.subr.mxu0 0.0
    %158 = vmatpush1.msra.mxu0 %v131
    %159 = vmatprep.subr.mxu0 0.0
    %160 = vmatpush1.msra.mxu0 %v130
    %161 = vmatprep.subr.mxu0 0.0
    %162 = vmatpush1.msra.mxu0 %v129
    %163 = vmatprep.subr.mxu0 0.0
    %164 = vmatpush1.msra.mxu0 %v128
    %165 = vmatprep.subr.mxu0 0.0
    %166 = vmatpush1.msra.mxu0 %v127
    %167 = vmatprep.subr.mxu0 0.0
    %168 = vmatpush1.msra.mxu0 %v126
    %169 = vmatprep.subr.mxu0 0.0
    %170 = vmatpush1.msra.mxu0 %v125
    %171 = vmatprep.subr.mxu0 0.0
    %172 = vmatpush1.msra.mxu0 %v124
    %173 = vmatprep.subr.mxu0 0.0
    %174 = vmatpush1.msra.mxu0 %v123
    %175 = vmatprep.subr.mxu0 0.0
    %176 = vmatpush1.msra.mxu0 %v122
    %177 = vmatprep.subr.mxu0 0.0
    %178 = vmatpush2.msra.mxu0 0.0
    %179 = vmatprep.subr.mxu0 0.0
    %180 = vmatpush2.msra.mxu0 0.0
    %181 = vmatprep.subr.mxu0 0.0
    %182 = vmatpush2.msra.mxu0 0.0
    %183 = vmatprep.subr.mxu0 0.0
    %184 = vmatpush2.msra.mxu0 0.0
    %185 = vmatprep.subr.mxu0 0.0
    %186 = vmatpush2.msra.mxu0 0.0
    %187 = vmatprep.subr.mxu0 0.0
    %188 = vmatpush2.msra.mxu0 0.0
    %189 = vmatprep.subr.mxu0 0.0
    %190 = vmatpush2.msra.mxu0 0.0
    %191 = vmatprep.subr.mxu0 0.0
    %192 = vmatpush2.msra.mxu0 0.0
    %193 = vmatprep.subr.mxu0 0.0
    %194 = vmatpush2.msra.mxu0 0.0
    %195 = vmatprep.subr.mxu0 0.0
    %196 = vmatpush2.msra.mxu0 0.0
    %197 = vmatprep.subr.mxu0 0.0
    %198 = vmatpush2.msra.mxu0 0.0
    %199 = vmatprep.subr.mxu0 0.0
    %200 = vmatpush2.msra.mxu0 0.0
    %201 = vmatprep.subr.mxu0 0.0
    %202 = vmatpush2.msra.mxu0 0.0
    %203 = vmatprep.subr.mxu0 0.0
    %204 = vmatpush2.msra.mxu0 0.0
    %205 = vmatprep.subr.mxu0 0.0
    %206 = vmatpush2.msra.mxu0 0.0
    %207 = vmatprep.subr.mxu0 0.0
    %208 = vmatpush2.msra.mxu0 0.0
    %209 = vmatprep.mubr.f32.mxu0 0.0
    %210 = vmatmul.mubr.f32.gmra.mxu0 %v121
    %v211 = vpop.f32.mrf.mxu0
    %v212 = vadd.f32 %v143, %v211
    %v213 = vpop.f32.mrf.mxu0
    %214 = vdwg.mxu0
    %v215 = vtanh.pop %v212
    %v216 = vld [vmem:[%s5] sm:$0xff]
    %v217 = vld [vmem:[%s5 + $0x8] sm:$0xff]
    %v218 = vld [vmem:[%s5 + $0x10] sm:$0xff]
    %v219 = vld [vmem:[%s5 + $0x18] sm:$0xff]
    %v220 = vld [vmem:[%s5 + $0x20] sm:$0xff]
    %v221 = vld [vmem:[%s5 + $0x28] sm:$0xff]
    %v222 = vld [vmem:[%s5 + $0x30] sm:$0xff]
    %v223 = vld [vmem:[%s5 + $0x38] sm:$0xff]
    %v224 = vld [vmem:[%s5 + $0x40] sm:$0xff]
    %v225 = vld [vmem:[%s5 + $0x48] sm:$0xff]
    %v226 = vld [vmem:[%s5 + $0x50] sm:$0xff]
    %v227 = vld [vmem:[%s5 + $0x58] sm:$0xff]
    %v228 = vld [vmem:[%s5 + $0x60] sm:$0xff]
    %v229 = vld [vmem:[%s5 + $0x68] sm:$0xff]
    %v230 = vld [vmem:[%s5 + $0x70] sm:$0xff]
    %v231 = vld [vmem:[%s5 + $0x78] sm:$0xff]
    %v232 = vld [vmem:[%s6] sm:$0x1]
    %v234 = vlaneseq
    %v235 = vshrl.u32 %v234, 7
    %v236 = vsub.s32 0, %v235
    %v237 = vrot.slane %v232, %v236
    %239 = vmatprep.subr.mxu0 0.0
    %240 = vmatpush1.msra.mxu0 %v231
    %241 = vmatprep.subr.mxu0 0.0
    %242 = vmatpush1.msra.mxu0 %v230
    %243 = vmatprep.subr.mxu0 0.0
    %244 = vmatpush1.msra.mxu0 %v229
    %245 = vmatprep.subr.mxu0 0.0
    %246 = vmatpush1.msra.mxu0 %v228
    %247 = vmatprep.subr.mxu0 0.0
    %248 = vmatpush1.msra.mxu0 %v227
    %249 = vmatprep.subr.mxu0 0.0
    %250 = vmatpush1.msra.mxu0 %v226
    %251 = vmatprep.subr.mxu0 0.0
    %252 = vmatpush1.msra.mxu0 %v225
    %253 = vmatprep.subr.mxu0 0.0
    %254 = vmatpush1.msra.mxu0 %v224
    %255 = vmatprep.subr.mxu0 0.0
    %256 = vmatpush1.msra.mxu0 %v223
    %257 = vmatprep.subr.mxu0 0.0
    %258 = vmatpush1.msra.mxu0 %v222
    %259 = vmatprep.subr.mxu0 0.0
    %260 = vmatpush1.msra.mxu0 %v221
    %261 = vmatprep.subr.mxu0 0.0
    %262 = vmatpush1.msra.mxu0 %v220
    %263 = vmatprep.subr.mxu0 0.0
    %264 = vmatpush1.msra.mxu0 %v219
    %265 = vmatprep.subr.mxu0 0.0
    %266 = vmatpush1.msra.mxu0 %v218
    %267 = vmatprep.subr.mxu0 0.0
    %268 = vmatpush1.msra.mxu0 %v217
    %269 = vmatprep.subr.mxu0 0.0
    %270 = vmatpush1.msra.mxu0 %v216
    %271 = vmatprep.subr.mxu0 0.0
    %272 = vmatpush2.msra.mxu0 0.0
    %273 = vmatprep.subr.mxu0 0.0
    %274 = vmatpush2.msra.mxu0 0.0
    %275 = vmatprep.subr.mxu0 0.0
    %276 = vmatpush2.msra.mxu0 0.0
    %277 = vmatprep.subr.mxu0 0.0
    %278 = vmatpush2.msra.mxu0 0.0
    %279 = vmatprep.subr.mxu0 0.0
    %280 = vmatpush2.msra.mxu0 0.0
    %281 = vmatprep.subr.mxu0 0.0
    %282 = vmatpush2.msra.mxu0 0.0
    %283 = vmatprep.subr.mxu0 0.0
    %284 = vmatpush2.msra.mxu0 0.0
    %285 = vmatprep.subr.mxu0 0.0
    %286 = vmatpush2.msra.mxu0 0.0
    %287 = vmatprep.subr.mxu0 0.0
    %288 = vmatpush2.msra.mxu0 0.0
    %289 = vmatprep.subr.mxu0 0.0
    %290 = vmatpush2.msra.mxu0 0.0
    %291 = vmatprep.subr.mxu0 0.0
    %292 = vmatpush2.msra.mxu0 0.0
    %293 = vmatprep.subr.mxu0 0.0
    %294 = vmatpush2.msra.mxu0 0.0
    %295 = vmatprep.subr.mxu0 0.0
    %296 = vmatpush2.msra.mxu0 0.0
    %297 = vmatprep.subr.mxu0 0.0
    %298 = vmatpush2.msra.mxu0 0.0
    %299 = vmatprep.subr.mxu0 0.0
    %300 = vmatpush2.msra.mxu0 0.0
    %301 = vmatprep.subr.mxu0 0.0
    %302 = vmatpush2.msra.mxu0 0.0
    %303 = vmatprep.mubr.f32.mxu0 0.0
    %304 = vmatmul.mubr.f32.gmra.mxu0 %v215
    %v305 = vpop.f32.mrf.mxu0
    %v306 = vadd.f32 %v237, %v305
    %v307 = vpop.f32.mrf.mxu0
    %308 = vdwg.mxu0
    %v309 = vtanh.pop %v306
    %310 = vst [vmem:[#allocation2] sm:$0xff] %v309
    // Predicated region
    $region30: #{singe_dnn_embedding_forward.1} parent=1 // pred_check
      _
    $region31: #{singe_dnn_embedding_forward.1} parent=1 // pred_check_branch
      %312 = sbr.rel (0) target = $region33
    $region32: #{singe_dnn_embedding_forward.1} parent=1 // pred_region
      %s314 = ssub.s32 128, 128
      %315 = vsyncadd [#allocation3], %s314
      %s317 = sshll.u32 [#allocation2], 4
      %s318 = int_to_ptr.vmem [resolvable:$true] %s317
      %320 = dma.vmem_to_hbm [thread:$0]  %s318, 128, %s7, [#allocation3]
    $region33: #{singe_dnn_embedding_forward.1} parent=1 // pred_fallthru
      _
    // Predicated region
    $region34: #{singe_dnn_embedding_forward.1} parent=1 // pred_check
      _
    $region35: #{singe_dnn_embedding_forward.1} parent=1 // pred_check_branch
      %322 = sbr.rel (0) target = $region37
    $region36: #{singe_dnn_embedding_forward.1} parent=1 // pred_region
      %323 = dma.done [#allocation3], 128
    $region37: #{singe_dnn_embedding_forward.1} parent=1 // pred_fallthru
      _
    %324 = vsyncpa [#allocation3], 1

</llo_original>
